<compile_context>
chip_gen: v7x
topology: tpu7x:2x2x1
jax: 0.10.0
libtpu: 0.0.40
codegen_flags: <defaults>
</compile_context>

<pallas_src>
import functools

import jax
import jax.numpy as jnp
from jax.experimental import pallas as pl
from jax.experimental.pallas import tpu as pltpu


def _bigram_kernel(idx_ref, tgt_ref, table_ref, logits_ref, loss_ref, *, vocab):
    """SMEM-indexed embedding gather + mean cross-entropy.

    idx_ref, tgt_ref : (N,) int32 in SMEM (scalar prefetch)
    table_ref        : (V, V_pad) f32 in VMEM (lane-padded embedding table)
    logits_ref       : (N, V_pad) f32 output (lane-dense)
    loss_ref         : (1,) f32 SMEM scalar output (mean CE over the N rows)
    """
    N = logits_ref.shape[0]
    V_pad = logits_ref.shape[1]

    # One lane-iota, reused for the per-row target one-hot (built once per tile).
    lane_row = jax.lax.broadcasted_iota(jnp.int32, (1, V_pad), 1)   # (1, V_pad)

    def gather_row(i, tgt_sum):
        # Embedding lookup: dynamic sublane load of one table row.
        row = table_ref[pl.ds(idx_ref[i], 1), :]                    # (1, V_pad)
        logits_ref[pl.ds(i, 1), :] = row
        # logits[i, tgt[i]] extracted via a lane one-hot against the SMEM scalar.
        tgt_onehot = (lane_row == tgt_ref[i]).astype(jnp.float32)   # (1, V_pad)
        return tgt_sum + jnp.sum(row * tgt_onehot, axis=-1, keepdims=True)

    tgt_sum = jax.lax.fori_loop(
        0, N, gather_row, jnp.zeros((1, 1), jnp.float32), unroll=True)

    # Mean cross-entropy: mean_i( logsumexp(logits_i) - logits_i[target_i] ).
    logits = logits_ref[...]                                        # (N, V_pad)
    lane = jax.lax.broadcasted_iota(jnp.int32, (N, V_pad), 1)
    masked = jnp.where(lane < vocab, logits, -jnp.inf)              # hide padding
    m = jnp.max(masked, axis=-1, keepdims=True)                     # (N, 1)
    lse = m + jnp.log(jnp.sum(jnp.exp(masked - m), axis=-1, keepdims=True))
    loss = (jnp.sum(lse) - tgt_sum[0, 0]) / jnp.float32(N)
    loss_ref[0] = loss                                              # SMEM scalar


@functools.partial(jax.jit, static_argnames=("vocab_size",))
def _bigram_pallas(idx_flat, tgt_flat, table, *, vocab_size):
    N = idx_flat.shape[0]
    V = vocab_size
    V_pad = pl.cdiv(V, 128) * 128

    # Lane-pad the table so the logits output is lane-dense (V=65 -> 128).
    table_p = jnp.pad(table.astype(jnp.float32), ((0, 0), (0, V_pad - V)))

    logits_p, loss = pl.pallas_call(
        functools.partial(_bigram_kernel, vocab=V),
        out_shape=(
            jax.ShapeDtypeStruct((N, V_pad), jnp.float32),
            jax.ShapeDtypeStruct((1,), jnp.float32),
        ),
        grid_spec=pltpu.PrefetchScalarGridSpec(
            num_scalar_prefetch=2,                 # idx, targets -> SMEM
            grid=(1,),
            in_specs=[
                pl.BlockSpec((V, V_pad), lambda i, idx_sm, tgt_sm: (0, 0)),
            ],
            out_specs=(
                pl.BlockSpec((N, V_pad), lambda i, idx_sm, tgt_sm: (0, 0)),
                pl.BlockSpec(memory_space=pltpu.MemorySpace.SMEM),
            ),
        ),
        compiler_params=pltpu.CompilerParams(
            dimension_semantics=("arbitrary",)),
    )(idx_flat, tgt_flat, table_p)

    return logits_p[:, :V], loss


def bigram_forward(table, idx, targets=None):
    """Mirrors BigramLanguageModel.forward.

    Returns (logits, loss):
      - targets is None:  logits has shape (B, T, V), loss is None.
      - targets given:    logits has shape (B*T, V), loss is a scalar.
    """
    B, T = idx.shape
    V = table.shape[0]
    N = B * T
    idx_flat = idx.reshape(N).astype(jnp.int32)
    if targets is None:
        tgt_flat = jnp.zeros((N,), jnp.int32)  # dummy; loss discarded
        logits, _ = _bigram_pallas(idx_flat, tgt_flat, table, vocab_size=V)
        return logits.reshape(B, T, V), None
    tgt_flat = targets.reshape(N).astype(jnp.int32)
    logits, loss = _bigram_pallas(idx_flat, tgt_flat, table, vocab_size=V)
    return logits, loss[0]


# TODO(synk): generate() (autoregressive sampling with torch.multinomial) is a
# host-side Python loop + categorical sampling; it is not implemented as a kernel.


if __name__ == "__main__":
    vocab_size = 65   # e.g. tiny-Shakespeare character vocab
    B, T = 2, 8

    key = jax.random.PRNGKey(0)
    k_tab, k_idx, k_tgt = jax.random.split(key, 3)

    # nn.Embedding default init: N(0, 1)
    table = jax.random.normal(k_tab, (vocab_size, vocab_size), jnp.float32)
    idx = jax.random.randint(k_idx, (B, T), 0, vocab_size, jnp.int32)
    targets = jax.random.randint(k_tgt, (B, T), 0, vocab_size, jnp.int32)

    logits, loss = bigram_forward(table, idx, targets)
    jax.block_until_ready((logits, loss))

    # Pure-JAX reference check (embedding gather + mean cross-entropy).
    ref_logits = table[idx.reshape(-1)]
    lse = jax.scipy.special.logsumexp(ref_logits, axis=-1)
    tgt_logit = jnp.take_along_axis(
        ref_logits, targets.reshape(-1, 1), axis=-1)[:, 0]
    ref_loss = jnp.mean(lse - tgt_logit)
    assert logits.shape == (B * T, vocab_size)
    assert jnp.allclose(logits, ref_logits, atol=1e-5)
    assert jnp.allclose(loss, ref_loss, atol=1e-5)

    # Also exercise the targets=None path (logits reshaped to (B, T, V)).
    logits3, loss_none = bigram_forward(table, idx, None)
    jax.block_until_ready(logits3)
    assert logits3.shape == (B, T, vocab_size) and loss_none is None
    assert jnp.allclose(logits3.reshape(B * T, vocab_size), ref_logits, atol=1e-5)

    print("KERNEL_OK")
</pallas_src>

<mosaic_0001>
module attributes {stable_mosaic.version = 11 : i64} {
  func.func @_bigram_kernel(%arg0: i32, %arg1: memref<16xi32, #tpu.memory_space<smem>>, %arg2: memref<16xi32, #tpu.memory_space<smem>>, %arg3: memref<65x128xf32, #tpu.memory_space<vmem>>, %arg4: memref<16x128xf32, #tpu.memory_space<vmem>>, %arg5: memref<1xf32, #tpu.memory_space<smem>>) attributes {dimension_semantics = [#tpu.dimension_semantics<arbitrary>], iteration_bounds = array<i64: 1>, scalar_prefetch = 2 : i64, scratch_operands = 0 : i64, tpu.core_type = #tpu.core_type<tc>, window_params = [{pipeline_mode = #tpu.pipeline_mode<synchronous>, transform_indices = @transform_0, window_bounds = array<i64: 65, 128>}, {pipeline_mode = #tpu.pipeline_mode<synchronous>, transform_indices = @transform_1, window_bounds = array<i64: 16, 128>}, {transform_indices = @transform_2, window_bounds = array<i64: 1>}]} {
    %0 = tpu.iota {dimensions = array<i32: 1>} : vector<1x128xi32>
    %cst = arith.constant 0.000000e+00 : f32
    %1 = vector.broadcast %cst : f32 to vector<1x1xf32>
    %c0_i32 = arith.constant 0 : i32
    %2 = arith.index_cast %c0_i32 : i32 to index
    %3 = memref.load %arg1[%2] : memref<16xi32, #tpu.memory_space<smem>>
    %4 = arith.index_cast %3 : i32 to index
    %c0 = arith.constant 0 : index
    %5 = vector.load %arg3[%4, %c0] : memref<65x128xf32, #tpu.memory_space<vmem>>, vector<1x128xf32>
    %6 = arith.index_cast %c0_i32 : i32 to index
    %c0_0 = arith.constant 0 : index
    %7 = vector.load %arg4[%6, %c0_0] : memref<16x128xf32, #tpu.memory_space<vmem>>, vector<1x128xf32>
    tpu.vector_store %arg4[%6, %c0_0], %5 {strides = array<i32>} : memref<16x128xf32, #tpu.memory_space<vmem>>, vector<1x128xf32>,
    %8 = arith.index_cast %c0_i32 : i32 to index
    %9 = memref.load %arg2[%8] : memref<16xi32, #tpu.memory_space<smem>>
    %10 = vector.broadcast %9 : i32 to vector<1x128xi32>
    %11 = arith.cmpi eq, %0, %10 : vector<1x128xi32>
    %12 = arith.extui %11 : vector<1x128xi1> to vector<1x128xi32>
    %13 = arith.sitofp %12 : vector<1x128xi32> to vector<1x128xf32>
    %14 = arith.mulf %5, %13 : vector<1x128xf32>
    %cst_1 = arith.constant dense<0.000000e+00> : vector<1xf32>
    %15 = vector.multi_reduction <add>, %14, %cst_1 [1] : vector<1x128xf32> to vector<1xf32>
    %16 = vector.shape_cast %15 : vector<1xf32> to vector<1x1xf32>
    %17 = arith.addf %1, %16 : vector<1x1xf32>
    %c1_i32 = arith.constant 1 : i32
    %18 = arith.index_cast %c1_i32 : i32 to index
    %19 = memref.load %arg1[%18] : memref<16xi32, #tpu.memory_space<smem>>
    %20 = arith.index_cast %19 : i32 to index
    %c0_2 = arith.constant 0 : index
    %21 = vector.load %arg3[%20, %c0_2] : memref<65x128xf32, #tpu.memory_space<vmem>>, vector<1x128xf32>
    %22 = arith.index_cast %c1_i32 : i32 to index
    %c0_3 = arith.constant 0 : index
    %23 = vector.load %arg4[%22, %c0_3] : memref<16x128xf32, #tpu.memory_space<vmem>>, vector<1x128xf32>
    tpu.vector_store %arg4[%22, %c0_3], %21 {strides = array<i32>} : memref<16x128xf32, #tpu.memory_space<vmem>>, vector<1x128xf32>,
    %24 = arith.index_cast %c1_i32 : i32 to index
    %25 = memref.load %arg2[%24] : memref<16xi32, #tpu.memory_space<smem>>
    %26 = vector.broadcast %25 : i32 to vector<1x128xi32>
    %27 = arith.cmpi eq, %0, %26 : vector<1x128xi32>
    %28 = arith.extui %27 : vector<1x128xi1> to vector<1x128xi32>
    %29 = arith.sitofp %28 : vector<1x128xi32> to vector<1x128xf32>
    %30 = arith.mulf %21, %29 : vector<1x128xf32>
    %cst_4 = arith.constant dense<0.000000e+00> : vector<1xf32>
    %31 = vector.multi_reduction <add>, %30, %cst_4 [1] : vector<1x128xf32> to vector<1xf32>
    %32 = vector.shape_cast %31 : vector<1xf32> to vector<1x1xf32>
    %33 = arith.addf %17, %32 : vector<1x1xf32>
    %c2_i32 = arith.constant 2 : i32
    %34 = arith.index_cast %c2_i32 : i32 to index
    %35 = memref.load %arg1[%34] : memref<16xi32, #tpu.memory_space<smem>>
    %36 = arith.index_cast %35 : i32 to index
    %c0_5 = arith.constant 0 : index
    %37 = vector.load %arg3[%36, %c0_5] : memref<65x128xf32, #tpu.memory_space<vmem>>, vector<1x128xf32>
    %38 = arith.index_cast %c2_i32 : i32 to index
    %c0_6 = arith.constant 0 : index
    %39 = vector.load %arg4[%38, %c0_6] : memref<16x128xf32, #tpu.memory_space<vmem>>, vector<1x128xf32>
    tpu.vector_store %arg4[%38, %c0_6], %37 {strides = array<i32>} : memref<16x128xf32, #tpu.memory_space<vmem>>, vector<1x128xf32>,
    %40 = arith.index_cast %c2_i32 : i32 to index
    %41 = memref.load %arg2[%40] : memref<16xi32, #tpu.memory_space<smem>>
    %42 = vector.broadcast %41 : i32 to vector<1x128xi32>
    %43 = arith.cmpi eq, %0, %42 : vector<1x128xi32>
    %44 = arith.extui %43 : vector<1x128xi1> to vector<1x128xi32>
    %45 = arith.sitofp %44 : vector<1x128xi32> to vector<1x128xf32>
    %46 = arith.mulf %37, %45 : vector<1x128xf32>
    %cst_7 = arith.constant dense<0.000000e+00> : vector<1xf32>
    %47 = vector.multi_reduction <add>, %46, %cst_7 [1] : vector<1x128xf32> to vector<1xf32>
    %48 = vector.shape_cast %47 : vector<1xf32> to vector<1x1xf32>
    %49 = arith.addf %33, %48 : vector<1x1xf32>
    %c3_i32 = arith.constant 3 : i32
    %50 = arith.index_cast %c3_i32 : i32 to index
    %51 = memref.load %arg1[%50] : memref<16xi32, #tpu.memory_space<smem>>
    %52 = arith.index_cast %51 : i32 to index
    %c0_8 = arith.constant 0 : index
    %53 = vector.load %arg3[%52, %c0_8] : memref<65x128xf32, #tpu.memory_space<vmem>>, vector<1x128xf32>
    %54 = arith.index_cast %c3_i32 : i32 to index
    %c0_9 = arith.constant 0 : index
    %55 = vector.load %arg4[%54, %c0_9] : memref<16x128xf32, #tpu.memory_space<vmem>>, vector<1x128xf32>
    tpu.vector_store %arg4[%54, %c0_9], %53 {strides = array<i32>} : memref<16x128xf32, #tpu.memory_space<vmem>>, vector<1x128xf32>,
    %56 = arith.index_cast %c3_i32 : i32 to index
    %57 = memref.load %arg2[%56] : memref<16xi32, #tpu.memory_space<smem>>
    %58 = vector.broadcast %57 : i32 to vector<1x128xi32>
    %59 = arith.cmpi eq, %0, %58 : vector<1x128xi32>
    %60 = arith.extui %59 : vector<1x128xi1> to vector<1x128xi32>
    %61 = arith.sitofp %60 : vector<1x128xi32> to vector<1x128xf32>
    %62 = arith.mulf %53, %61 : vector<1x128xf32>
    %cst_10 = arith.constant dense<0.000000e+00> : vector<1xf32>
    %63 = vector.multi_reduction <add>, %62, %cst_10 [1] : vector<1x128xf32> to vector<1xf32>
    %64 = vector.shape_cast %63 : vector<1xf32> to vector<1x1xf32>
    %65 = arith.addf %49, %64 : vector<1x1xf32>
    %c4_i32 = arith.constant 4 : i32
    %66 = arith.index_cast %c4_i32 : i32 to index
    %67 = memref.load %arg1[%66] : memref<16xi32, #tpu.memory_space<smem>>
    %68 = arith.index_cast %67 : i32 to index
    %c0_11 = arith.constant 0 : index
    %69 = vector.load %arg3[%68, %c0_11] : memref<65x128xf32, #tpu.memory_space<vmem>>, vector<1x128xf32>
    %70 = arith.index_cast %c4_i32 : i32 to index
    %c0_12 = arith.constant 0 : index
    %71 = vector.load %arg4[%70, %c0_12] : memref<16x128xf32, #tpu.memory_space<vmem>>, vector<1x128xf32>
    tpu.vector_store %arg4[%70, %c0_12], %69 {strides = array<i32>} : memref<16x128xf32, #tpu.memory_space<vmem>>, vector<1x128xf32>,
    %72 = arith.index_cast %c4_i32 : i32 to index
    %73 = memref.load %arg2[%72] : memref<16xi32, #tpu.memory_space<smem>>
    %74 = vector.broadcast %73 : i32 to vector<1x128xi32>
    %75 = arith.cmpi eq, %0, %74 : vector<1x128xi32>
    %76 = arith.extui %75 : vector<1x128xi1> to vector<1x128xi32>
    %77 = arith.sitofp %76 : vector<1x128xi32> to vector<1x128xf32>
    %78 = arith.mulf %69, %77 : vector<1x128xf32>
    %cst_13 = arith.constant dense<0.000000e+00> : vector<1xf32>
    %79 = vector.multi_reduction <add>, %78, %cst_13 [1] : vector<1x128xf32> to vector<1xf32>
    %80 = vector.shape_cast %79 : vector<1xf32> to vector<1x1xf32>
    %81 = arith.addf %65, %80 : vector<1x1xf32>
    %c5_i32 = arith.constant 5 : i32
    %82 = arith.index_cast %c5_i32 : i32 to index
    %83 = memref.load %arg1[%82] : memref<16xi32, #tpu.memory_space<smem>>
    %84 = arith.index_cast %83 : i32 to index
    %c0_14 = arith.constant 0 : index
    %85 = vector.load %arg3[%84, %c0_14] : memref<65x128xf32, #tpu.memory_space<vmem>>, vector<1x128xf32>
    %86 = arith.index_cast %c5_i32 : i32 to index
    %c0_15 = arith.constant 0 : index
    %87 = vector.load %arg4[%86, %c0_15] : memref<16x128xf32, #tpu.memory_space<vmem>>, vector<1x128xf32>
    tpu.vector_store %arg4[%86, %c0_15], %85 {strides = array<i32>} : memref<16x128xf32, #tpu.memory_space<vmem>>, vector<1x128xf32>,
    %88 = arith.index_cast %c5_i32 : i32 to index
    %89 = memref.load %arg2[%88] : memref<16xi32, #tpu.memory_space<smem>>
    %90 = vector.broadcast %89 : i32 to vector<1x128xi32>
    %91 = arith.cmpi eq, %0, %90 : vector<1x128xi32>
    %92 = arith.extui %91 : vector<1x128xi1> to vector<1x128xi32>
    %93 = arith.sitofp %92 : vector<1x128xi32> to vector<1x128xf32>
    %94 = arith.mulf %85, %93 : vector<1x128xf32>
    %cst_16 = arith.constant dense<0.000000e+00> : vector<1xf32>
    %95 = vector.multi_reduction <add>, %94, %cst_16 [1] : vector<1x128xf32> to vector<1xf32>
    %96 = vector.shape_cast %95 : vector<1xf32> to vector<1x1xf32>
    %97 = arith.addf %81, %96 : vector<1x1xf32>
    %c6_i32 = arith.constant 6 : i32
    %98 = arith.index_cast %c6_i32 : i32 to index
    %99 = memref.load %arg1[%98] : memref<16xi32, #tpu.memory_space<smem>>
    %100 = arith.index_cast %99 : i32 to index
    %c0_17 = arith.constant 0 : index
    %101 = vector.load %arg3[%100, %c0_17] : memref<65x128xf32, #tpu.memory_space<vmem>>, vector<1x128xf32>
    %102 = arith.index_cast %c6_i32 : i32 to index
    %c0_18 = arith.constant 0 : index
    %103 = vector.load %arg4[%102, %c0_18] : memref<16x128xf32, #tpu.memory_space<vmem>>, vector<1x128xf32>
    tpu.vector_store %arg4[%102, %c0_18], %101 {strides = array<i32>} : memref<16x128xf32, #tpu.memory_space<vmem>>, vector<1x128xf32>,
    %104 = arith.index_cast %c6_i32 : i32 to index
    %105 = memref.load %arg2[%104] : memref<16xi32, #tpu.memory_space<smem>>
    %106 = vector.broadcast %105 : i32 to vector<1x128xi32>
    %107 = arith.cmpi eq, %0, %106 : vector<1x128xi32>
    %108 = arith.extui %107 : vector<1x128xi1> to vector<1x128xi32>
    %109 = arith.sitofp %108 : vector<1x128xi32> to vector<1x128xf32>
    %110 = arith.mulf %101, %109 : vector<1x128xf32>
    %cst_19 = arith.constant dense<0.000000e+00> : vector<1xf32>
    %111 = vector.multi_reduction <add>, %110, %cst_19 [1] : vector<1x128xf32> to vector<1xf32>
    %112 = vector.shape_cast %111 : vector<1xf32> to vector<1x1xf32>
    %113 = arith.addf %97, %112 : vector<1x1xf32>
    %c7_i32 = arith.constant 7 : i32
    %114 = arith.index_cast %c7_i32 : i32 to index
    %115 = memref.load %arg1[%114] : memref<16xi32, #tpu.memory_space<smem>>
    %116 = arith.index_cast %115 : i32 to index
    %c0_20 = arith.constant 0 : index
    %117 = vector.load %arg3[%116, %c0_20] : memref<65x128xf32, #tpu.memory_space<vmem>>, vector<1x128xf32>
    %118 = arith.index_cast %c7_i32 : i32 to index
    %c0_21 = arith.constant 0 : index
    %119 = vector.load %arg4[%118, %c0_21] : memref<16x128xf32, #tpu.memory_space<vmem>>, vector<1x128xf32>
    tpu.vector_store %arg4[%118, %c0_21], %117 {strides = array<i32>} : memref<16x128xf32, #tpu.memory_space<vmem>>, vector<1x128xf32>,
    %120 = arith.index_cast %c7_i32 : i32 to index
    %121 = memref.load %arg2[%120] : memref<16xi32, #tpu.memory_space<smem>>
    %122 = vector.broadcast %121 : i32 to vector<1x128xi32>
    %123 = arith.cmpi eq, %0, %122 : vector<1x128xi32>
    %124 = arith.extui %123 : vector<1x128xi1> to vector<1x128xi32>
    %125 = arith.sitofp %124 : vector<1x128xi32> to vector<1x128xf32>
    %126 = arith.mulf %117, %125 : vector<1x128xf32>
    %cst_22 = arith.constant dense<0.000000e+00> : vector<1xf32>
    %127 = vector.multi_reduction <add>, %126, %cst_22 [1] : vector<1x128xf32> to vector<1xf32>
    %128 = vector.shape_cast %127 : vector<1xf32> to vector<1x1xf32>
    %129 = arith.addf %113, %128 : vector<1x1xf32>
    %c8_i32 = arith.constant 8 : i32
    %130 = arith.index_cast %c8_i32 : i32 to index
    %131 = memref.load %arg1[%130] : memref<16xi32, #tpu.memory_space<smem>>
    %132 = arith.index_cast %131 : i32 to index
    %c0_23 = arith.constant 0 : index
    %133 = vector.load %arg3[%132, %c0_23] : memref<65x128xf32, #tpu.memory_space<vmem>>, vector<1x128xf32>
    %134 = arith.index_cast %c8_i32 : i32 to index
    %c0_24 = arith.constant 0 : index
    %135 = vector.load %arg4[%134, %c0_24] : memref<16x128xf32, #tpu.memory_space<vmem>>, vector<1x128xf32>
    tpu.vector_store %arg4[%134, %c0_24], %133 {strides = array<i32>} : memref<16x128xf32, #tpu.memory_space<vmem>>, vector<1x128xf32>,
    %136 = arith.index_cast %c8_i32 : i32 to index
    %137 = memref.load %arg2[%136] : memref<16xi32, #tpu.memory_space<smem>>
    %138 = vector.broadcast %137 : i32 to vector<1x128xi32>
    %139 = arith.cmpi eq, %0, %138 : vector<1x128xi32>
    %140 = arith.extui %139 : vector<1x128xi1> to vector<1x128xi32>
    %141 = arith.sitofp %140 : vector<1x128xi32> to vector<1x128xf32>
    %142 = arith.mulf %133, %141 : vector<1x128xf32>
    %cst_25 = arith.constant dense<0.000000e+00> : vector<1xf32>
    %143 = vector.multi_reduction <add>, %142, %cst_25 [1] : vector<1x128xf32> to vector<1xf32>
    %144 = vector.shape_cast %143 : vector<1xf32> to vector<1x1xf32>
    %145 = arith.addf %129, %144 : vector<1x1xf32>
    %c9_i32 = arith.constant 9 : i32
    %146 = arith.index_cast %c9_i32 : i32 to index
    %147 = memref.load %arg1[%146] : memref<16xi32, #tpu.memory_space<smem>>
    %148 = arith.index_cast %147 : i32 to index
    %c0_26 = arith.constant 0 : index
    %149 = vector.load %arg3[%148, %c0_26] : memref<65x128xf32, #tpu.memory_space<vmem>>, vector<1x128xf32>
    %150 = arith.index_cast %c9_i32 : i32 to index
    %c0_27 = arith.constant 0 : index
    %151 = vector.load %arg4[%150, %c0_27] : memref<16x128xf32, #tpu.memory_space<vmem>>, vector<1x128xf32>
    tpu.vector_store %arg4[%150, %c0_27], %149 {strides = array<i32>} : memref<16x128xf32, #tpu.memory_space<vmem>>, vector<1x128xf32>,
    %152 = arith.index_cast %c9_i32 : i32 to index
    %153 = memref.load %arg2[%152] : memref<16xi32, #tpu.memory_space<smem>>
    %154 = vector.broadcast %153 : i32 to vector<1x128xi32>
    %155 = arith.cmpi eq, %0, %154 : vector<1x128xi32>
    %156 = arith.extui %155 : vector<1x128xi1> to vector<1x128xi32>
    %157 = arith.sitofp %156 : vector<1x128xi32> to vector<1x128xf32>
    %158 = arith.mulf %149, %157 : vector<1x128xf32>
    %cst_28 = arith.constant dense<0.000000e+00> : vector<1xf32>
    %159 = vector.multi_reduction <add>, %158, %cst_28 [1] : vector<1x128xf32> to vector<1xf32>
    %160 = vector.shape_cast %159 : vector<1xf32> to vector<1x1xf32>
    %161 = arith.addf %145, %160 : vector<1x1xf32>
    %c10_i32 = arith.constant 10 : i32
    %162 = arith.index_cast %c10_i32 : i32 to index
    %163 = memref.load %arg1[%162] : memref<16xi32, #tpu.memory_space<smem>>
    %164 = arith.index_cast %163 : i32 to index
    %c0_29 = arith.constant 0 : index
    %165 = vector.load %arg3[%164, %c0_29] : memref<65x128xf32, #tpu.memory_space<vmem>>, vector<1x128xf32>
    %166 = arith.index_cast %c10_i32 : i32 to index
    %c0_30 = arith.constant 0 : index
    %167 = vector.load %arg4[%166, %c0_30] : memref<16x128xf32, #tpu.memory_space<vmem>>, vector<1x128xf32>
    tpu.vector_store %arg4[%166, %c0_30], %165 {strides = array<i32>} : memref<16x128xf32, #tpu.memory_space<vmem>>, vector<1x128xf32>,
    %168 = arith.index_cast %c10_i32 : i32 to index
    %169 = memref.load %arg2[%168] : memref<16xi32, #tpu.memory_space<smem>>
    %170 = vector.broadcast %169 : i32 to vector<1x128xi32>
    %171 = arith.cmpi eq, %0, %170 : vector<1x128xi32>
    %172 = arith.extui %171 : vector<1x128xi1> to vector<1x128xi32>
    %173 = arith.sitofp %172 : vector<1x128xi32> to vector<1x128xf32>
    %174 = arith.mulf %165, %173 : vector<1x128xf32>
    %cst_31 = arith.constant dense<0.000000e+00> : vector<1xf32>
    %175 = vector.multi_reduction <add>, %174, %cst_31 [1] : vector<1x128xf32> to vector<1xf32>
    %176 = vector.shape_cast %175 : vector<1xf32> to vector<1x1xf32>
    %177 = arith.addf %161, %176 : vector<1x1xf32>
    %c11_i32 = arith.constant 11 : i32
    %178 = arith.index_cast %c11_i32 : i32 to index
    %179 = memref.load %arg1[%178] : memref<16xi32, #tpu.memory_space<smem>>
    %180 = arith.index_cast %179 : i32 to index
    %c0_32 = arith.constant 0 : index
    %181 = vector.load %arg3[%180, %c0_32] : memref<65x128xf32, #tpu.memory_space<vmem>>, vector<1x128xf32>
    %182 = arith.index_cast %c11_i32 : i32 to index
    %c0_33 = arith.constant 0 : index
    %183 = vector.load %arg4[%182, %c0_33] : memref<16x128xf32, #tpu.memory_space<vmem>>, vector<1x128xf32>
    tpu.vector_store %arg4[%182, %c0_33], %181 {strides = array<i32>} : memref<16x128xf32, #tpu.memory_space<vmem>>, vector<1x128xf32>,
    %184 = arith.index_cast %c11_i32 : i32 to index
    %185 = memref.load %arg2[%184] : memref<16xi32, #tpu.memory_space<smem>>
    %186 = vector.broadcast %185 : i32 to vector<1x128xi32>
    %187 = arith.cmpi eq, %0, %186 : vector<1x128xi32>
    %188 = arith.extui %187 : vector<1x128xi1> to vector<1x128xi32>
    %189 = arith.sitofp %188 : vector<1x128xi32> to vector<1x128xf32>
    %190 = arith.mulf %181, %189 : vector<1x128xf32>
    %cst_34 = arith.constant dense<0.000000e+00> : vector<1xf32>
    %191 = vector.multi_reduction <add>, %190, %cst_34 [1] : vector<1x128xf32> to vector<1xf32>
    %192 = vector.shape_cast %191 : vector<1xf32> to vector<1x1xf32>
    %193 = arith.addf %177, %192 : vector<1x1xf32>
    %c12_i32 = arith.constant 12 : i32
    %194 = arith.index_cast %c12_i32 : i32 to index
    %195 = memref.load %arg1[%194] : memref<16xi32, #tpu.memory_space<smem>>
    %196 = arith.index_cast %195 : i32 to index
    %c0_35 = arith.constant 0 : index
    %197 = vector.load %arg3[%196, %c0_35] : memref<65x128xf32, #tpu.memory_space<vmem>>, vector<1x128xf32>
    %198 = arith.index_cast %c12_i32 : i32 to index
    %c0_36 = arith.constant 0 : index
    %199 = vector.load %arg4[%198, %c0_36] : memref<16x128xf32, #tpu.memory_space<vmem>>, vector<1x128xf32>
    tpu.vector_store %arg4[%198, %c0_36], %197 {strides = array<i32>} : memref<16x128xf32, #tpu.memory_space<vmem>>, vector<1x128xf32>,
    %200 = arith.index_cast %c12_i32 : i32 to index
    %201 = memref.load %arg2[%200] : memref<16xi32, #tpu.memory_space<smem>>
    %202 = vector.broadcast %201 : i32 to vector<1x128xi32>
    %203 = arith.cmpi eq, %0, %202 : vector<1x128xi32>
    %204 = arith.extui %203 : vector<1x128xi1> to vector<1x128xi32>
    %205 = arith.sitofp %204 : vector<1x128xi32> to vector<1x128xf32>
    %206 = arith.mulf %197, %205 : vector<1x128xf32>
    %cst_37 = arith.constant dense<0.000000e+00> : vector<1xf32>
    %207 = vector.multi_reduction <add>, %206, %cst_37 [1] : vector<1x128xf32> to vector<1xf32>
    %208 = vector.shape_cast %207 : vector<1xf32> to vector<1x1xf32>
    %209 = arith.addf %193, %208 : vector<1x1xf32>
    %c13_i32 = arith.constant 13 : i32
    %210 = arith.index_cast %c13_i32 : i32 to index
    %211 = memref.load %arg1[%210] : memref<16xi32, #tpu.memory_space<smem>>
    %212 = arith.index_cast %211 : i32 to index
    %c0_38 = arith.constant 0 : index
    %213 = vector.load %arg3[%212, %c0_38] : memref<65x128xf32, #tpu.memory_space<vmem>>, vector<1x128xf32>
    %214 = arith.index_cast %c13_i32 : i32 to index
    %c0_39 = arith.constant 0 : index
    %215 = vector.load %arg4[%214, %c0_39] : memref<16x128xf32, #tpu.memory_space<vmem>>, vector<1x128xf32>
    tpu.vector_store %arg4[%214, %c0_39], %213 {strides = array<i32>} : memref<16x128xf32, #tpu.memory_space<vmem>>, vector<1x128xf32>,
    %216 = arith.index_cast %c13_i32 : i32 to index
    %217 = memref.load %arg2[%216] : memref<16xi32, #tpu.memory_space<smem>>
    %218 = vector.broadcast %217 : i32 to vector<1x128xi32>
    %219 = arith.cmpi eq, %0, %218 : vector<1x128xi32>
    %220 = arith.extui %219 : vector<1x128xi1> to vector<1x128xi32>
    %221 = arith.sitofp %220 : vector<1x128xi32> to vector<1x128xf32>
    %222 = arith.mulf %213, %221 : vector<1x128xf32>
    %cst_40 = arith.constant dense<0.000000e+00> : vector<1xf32>
    %223 = vector.multi_reduction <add>, %222, %cst_40 [1] : vector<1x128xf32> to vector<1xf32>
    %224 = vector.shape_cast %223 : vector<1xf32> to vector<1x1xf32>
    %225 = arith.addf %209, %224 : vector<1x1xf32>
    %c14_i32 = arith.constant 14 : i32
    %226 = arith.index_cast %c14_i32 : i32 to index
    %227 = memref.load %arg1[%226] : memref<16xi32, #tpu.memory_space<smem>>
    %228 = arith.index_cast %227 : i32 to index
    %c0_41 = arith.constant 0 : index
    %229 = vector.load %arg3[%228, %c0_41] : memref<65x128xf32, #tpu.memory_space<vmem>>, vector<1x128xf32>
    %230 = arith.index_cast %c14_i32 : i32 to index
    %c0_42 = arith.constant 0 : index
    %231 = vector.load %arg4[%230, %c0_42] : memref<16x128xf32, #tpu.memory_space<vmem>>, vector<1x128xf32>
    tpu.vector_store %arg4[%230, %c0_42], %229 {strides = array<i32>} : memref<16x128xf32, #tpu.memory_space<vmem>>, vector<1x128xf32>,
    %232 = arith.index_cast %c14_i32 : i32 to index
    %233 = memref.load %arg2[%232] : memref<16xi32, #tpu.memory_space<smem>>
    %234 = vector.broadcast %233 : i32 to vector<1x128xi32>
    %235 = arith.cmpi eq, %0, %234 : vector<1x128xi32>
    %236 = arith.extui %235 : vector<1x128xi1> to vector<1x128xi32>
    %237 = arith.sitofp %236 : vector<1x128xi32> to vector<1x128xf32>
    %238 = arith.mulf %229, %237 : vector<1x128xf32>
    %cst_43 = arith.constant dense<0.000000e+00> : vector<1xf32>
    %239 = vector.multi_reduction <add>, %238, %cst_43 [1] : vector<1x128xf32> to vector<1xf32>
    %240 = vector.shape_cast %239 : vector<1xf32> to vector<1x1xf32>
    %241 = arith.addf %225, %240 : vector<1x1xf32>
    %c15_i32 = arith.constant 15 : i32
    %242 = arith.index_cast %c15_i32 : i32 to index
    %243 = memref.load %arg1[%242] : memref<16xi32, #tpu.memory_space<smem>>
    %244 = arith.index_cast %243 : i32 to index
    %c0_44 = arith.constant 0 : index
    %245 = vector.load %arg3[%244, %c0_44] : memref<65x128xf32, #tpu.memory_space<vmem>>, vector<1x128xf32>
    %246 = arith.index_cast %c15_i32 : i32 to index
    %c0_45 = arith.constant 0 : index
    %247 = vector.load %arg4[%246, %c0_45] : memref<16x128xf32, #tpu.memory_space<vmem>>, vector<1x128xf32>
    tpu.vector_store %arg4[%246, %c0_45], %245 {strides = array<i32>} : memref<16x128xf32, #tpu.memory_space<vmem>>, vector<1x128xf32>,
    %248 = arith.index_cast %c15_i32 : i32 to index
    %249 = memref.load %arg2[%248] : memref<16xi32, #tpu.memory_space<smem>>
    %250 = vector.broadcast %249 : i32 to vector<1x128xi32>
    %251 = arith.cmpi eq, %0, %250 : vector<1x128xi32>
    %252 = arith.extui %251 : vector<1x128xi1> to vector<1x128xi32>
    %253 = arith.sitofp %252 : vector<1x128xi32> to vector<1x128xf32>
    %254 = arith.mulf %245, %253 : vector<1x128xf32>
    %cst_46 = arith.constant dense<0.000000e+00> : vector<1xf32>
    %255 = vector.multi_reduction <add>, %254, %cst_46 [1] : vector<1x128xf32> to vector<1xf32>
    %256 = vector.shape_cast %255 : vector<1xf32> to vector<1x1xf32>
    %257 = arith.addf %241, %256 : vector<1x1xf32>
    %c16_i32 = arith.constant 16 : i32
    %c0_47 = arith.constant 0 : index
    %c0_48 = arith.constant 0 : index
    %258 = vector.load %arg4[%c0_47, %c0_48] : memref<16x128xf32, #tpu.memory_space<vmem>>, vector<16x128xf32>
    %259 = tpu.iota {dimensions = array<i32: 1>} : vector<16x128xi32>
    %c65_i32 = arith.constant 65 : i32
    %260 = vector.broadcast %c65_i32 : i32 to vector<16x128xi32>
    %261 = arith.cmpi slt, %259, %260 : vector<16x128xi32>
    %cst_49 = arith.constant 0xFF800000 : f32
    %262 = vector.broadcast %cst_49 : f32 to vector<16x128xf32>
    %263 = arith.select %261, %258, %262 : vector<16x128xi1>, vector<16x128xf32>
    %cst_50 = arith.constant dense<0xFF800000> : vector<16xf32>
    %264 = vector.multi_reduction <maximumf>, %263, %cst_50 [1] : vector<16x128xf32> to vector<16xf32>
    %265 = vector.shape_cast %264 : vector<16xf32> to vector<16x1xf32>
    %266 = vector.broadcast %265 : vector<16x1xf32> to vector<16x128xf32>
    %267 = arith.subf %263, %266 : vector<16x128xf32>
    %268 = math.exp %267 : vector<16x128xf32>
    %cst_51 = arith.constant dense<0.000000e+00> : vector<16xf32>
    %269 = vector.multi_reduction <add>, %268, %cst_51 [1] : vector<16x128xf32> to vector<16xf32>
    %270 = vector.shape_cast %269 : vector<16xf32> to vector<16x1xf32>
    %271 = math.log %270 : vector<16x1xf32>
    %272 = arith.addf %265, %271 : vector<16x1xf32>
    %273 = vector.shape_cast %272 : vector<16x1xf32> to vector<1x16x1xf32>
    %cst_52 = arith.constant dense<0.000000e+00> : vector<1xf32>
    %274 = vector.multi_reduction <add>, %273, %cst_52 [1, 2] : vector<1x16x1xf32> to vector<1xf32>
    %275 = vector.shape_cast %274 : vector<1xf32> to vector<1x1x1xf32>
    %276 = vector.extract %275[0, 0, 0] : f32 from vector<1x1x1xf32>
    %277 = vector.extract %257[0, 0] : f32 from vector<1x1xf32>
    %278 = arith.subf %276, %277 : f32
    %cst_53 = arith.constant 1.600000e+01 : f32
    %279 = arith.divf %278, %cst_53 : f32
    %c0_54 = arith.constant 0 : index
    %280 = memref.load %arg5[%c0_54] : memref<1xf32, #tpu.memory_space<smem>>
    memref.store %279, %arg5[%c0_54] : memref<1xf32, #tpu.memory_space<smem>>
    return
  }
  func.func @transform_0(%arg0: i32, %arg1: memref<16xi32, #tpu.memory_space<smem>>, %arg2: memref<16xi32, #tpu.memory_space<smem>>) -> (i32, i32) {
    %c0_i32 = arith.constant 0 : i32
    %c0_i32_0 = arith.constant 0 : i32
    %c0_i32_1 = arith.constant 0 : i32
    return %c0_i32, %c0_i32_0 : i32, i32
  }
  func.func @transform_1(%arg0: i32, %arg1: memref<16xi32, #tpu.memory_space<smem>>, %arg2: memref<16xi32, #tpu.memory_space<smem>>) -> (i32, i32) {
    %c0_i32 = arith.constant 0 : i32
    %c0_i32_0 = arith.constant 0 : i32
    %c0_i32_1 = arith.constant 0 : i32
    return %c0_i32, %c0_i32_0 : i32, i32
  }
  func.func @transform_2(%arg0: i32, %arg1: memref<16xi32, #tpu.memory_space<smem>>, %arg2: memref<16xi32, #tpu.memory_space<smem>>) -> i32 {
    %c0_i32 = arith.constant 0 : i32
    %c0_i32_0 = arith.constant 0 : i32
    return %c0_i32 : i32
  }
}

</mosaic_0001>

<llo_original>
// kernel: _bigram_pallas.1
$region0: #{_bigram_pallas.1}
  #allocation0 [shape = 'u32[]', space=smem, size = 0x4, offset = 0x4, fixed_abs, tag = 'smem constant byte address 0x4 - core index']
  #allocation1 [shape = 'u32[144,128]{1,0:T(1,128)}', space=vmem, size = 0x12000, scoped, tag = 'internal scratch']
  #allocation2 [shape = 's32[1]{0}', space=sflag, size = 0x4, scoped, tag = 'scoped memory for _bigram_pallas.1']
  #allocation3 [shape = 'u8[512]{0}', space=smem, size = 0x200, scoped, tag = 'prefetched SMEM operand 0']
  #allocation4 [shape = 'u8[512]{0}', space=smem, size = 0x200, scoped, tag = 'prefetched SMEM operand 1']
  %s0 = inlined_call_operand.vmem [shape: s32[16], index: 0, kind: input, shape index: {}]
  %s1 = inlined_call_operand.vmem [shape: s32[16], index: 1, kind: input, shape index: {}]
  %s2 = inlined_call_operand.vmem [shape: f32[65,128], index: 2, kind: input, shape index: {}]
  %s3 = inlined_call_operand.hbm [shape: f32[16,128], index: 3, kind: output, shape index: {0}]
  %s4 = inlined_call_operand.hbm [shape: f32[1], index: 4, kind: output, shape index: {1}]
  %5 = xla_tuple %s3, %s4
  %s6 = sld [smem:[#allocation0]]
  $region22: #{_bigram_pallas.1} parent=0
    _
  %s8 = ssub.s32 1, %s6
  %s9 = scalar_select 0, %s8, %s6
  %s10 = sshll.u32 %s0, 4
  %s11 = int_to_ptr.vmem [resolvable:$true] %s10
  %13 = dma.vmem_to_smem %s11, 16, [#allocation3], [#allocation2]
  %s14 = sshll.u32 %s1, 4
  %s15 = int_to_ptr.vmem [resolvable:$true] %s14
  %17 = dma.vmem_to_smem %s15, 16, [#allocation4], [#allocation2]
  %18 = dma.done [#allocation2], 32
  %19 = sfence
  $region1: #{_bigram_pallas.1} parent=0
    #allocation5 [shape = 'u8[8192]{0}', space=vmem, size = 0x2000, scoped, tag = 'output window, operand 0, single buffered']
    #allocation6 [shape = 's32[1]{0}', space=sflag, size = 0x4, scoped, tag = 'scoped memory for _bigram_pallas.1']
    #allocation7 [shape = 's32[1]{0}', space=sflag, size = 0x4, scoped, tag = 'scoped memory for _bigram_pallas.1']
    #allocation8 [shape = 'u8[512]{0}', space=smem, size = 0x200, scoped, tag = 'output window, operand 1, single buffered']
    %20 = vsyncpa [#allocation6], 0
    %21 = vsyncpa [#allocation7], 0
    // Predicated region
    $region2: #{_bigram_pallas.1} parent=1 // pred_check
      _
    $region3: #{_bigram_pallas.1} parent=1 // pred_check_branch
      %23 = sbr.rel (0) target = $region5
    $region4: #{_bigram_pallas.1} parent=1 // pred_region
      _
    $region5: #{_bigram_pallas.1} parent=1 // pred_fallthru
      _
    %v24 = vlaneseq
    %v25 = vand.u32 %v24, 127
    %s26 = sld [smem:[#allocation3]]
    %s27 = scalar_lea.vmem %s2, %s26
    %v28 = vld [vmem:[%s27] sm:$0x1]
    %29 = vst [vmem:[#allocation5] sm:$0x1] %v28
    %s30 = sld [smem:[#allocation4]]
    %v31 = vstv %s30
    %vm32 = vcmp.eq.s32.totalorder %v25, %v31
    %v33 = vsel %vm32, 1, 0
    %v34 = vcvt.s32.f32 %v33
    %v35 = vmul.f32 %v28, %v34
    %vm36 = vcmask 1040384
    %v37 = vsel %vm36, %v35, 0.0
    %38 = vadd.xlane.f32.xlu0 %v37
    %v39 = vpop.xlane.xlu0 %38
    %v40 = vadd.f32 %v39, 0.0
    %s41 = sld [smem:[#allocation3 + $0x1]]
    %s42 = scalar_lea.vmem %s2, %s41
    %v43 = vld [vmem:[%s42] sm:$0x1]
    %44 = vst [vmem:[#allocation5 + $0x1] sm:$0x1] %v43
    %s45 = sld [smem:[#allocation4 + $0x1]]
    %v46 = vstv %s45
    %vm47 = vcmp.eq.s32.totalorder %v25, %v46
    %v48 = vsel %vm47, 1, 0
    %v49 = vcvt.s32.f32 %v48
    %v50 = vmul.f32 %v43, %v49
    %v51 = vsel %vm36, %v50, 0.0
    %52 = vadd.xlane.f32.xlu0 %v51
    %v53 = vpop.xlane.xlu0 %52
    %v54 = vadd.f32 %v40, %v53
    %s55 = sld [smem:[#allocation3 + $0x2]]
    %s56 = scalar_lea.vmem %s2, %s55
    %v57 = vld [vmem:[%s56] sm:$0x1]
    %58 = vst [vmem:[#allocation5 + $0x2] sm:$0x1] %v57
    %s59 = sld [smem:[#allocation4 + $0x2]]
    %v60 = vstv %s59
    %vm61 = vcmp.eq.s32.totalorder %v25, %v60
    %v62 = vsel %vm61, 1, 0
    %v63 = vcvt.s32.f32 %v62
    %v64 = vmul.f32 %v57, %v63
    %v65 = vsel %vm36, %v64, 0.0
    %66 = vadd.xlane.f32.xlu0 %v65
    %v67 = vpop.xlane.xlu0 %66
    %v68 = vadd.f32 %v54, %v67
    %s69 = sld [smem:[#allocation3 + $0x3]]
    %s70 = scalar_lea.vmem %s2, %s69
    %v71 = vld [vmem:[%s70] sm:$0x1]
    %72 = vst [vmem:[#allocation5 + $0x3] sm:$0x1] %v71
    %s73 = sld [smem:[#allocation4 + $0x3]]
    %v74 = vstv %s73
    %vm75 = vcmp.eq.s32.totalorder %v25, %v74
    %v76 = vsel %vm75, 1, 0
    %v77 = vcvt.s32.f32 %v76
    %v78 = vmul.f32 %v71, %v77
    %v79 = vsel %vm36, %v78, 0.0
    %80 = vadd.xlane.f32.xlu0 %v79
    %v81 = vpop.xlane.xlu0 %80
    %v82 = vadd.f32 %v68, %v81
    %s83 = sld [smem:[#allocation3 + $0x4]]
    %s84 = scalar_lea.vmem %s2, %s83
    %v85 = vld [vmem:[%s84] sm:$0x1]
    %86 = vst [vmem:[#allocation5 + $0x4] sm:$0x1] %v85
    %s87 = sld [smem:[#allocation4 + $0x4]]
    %v88 = vstv %s87
    %vm89 = vcmp.eq.s32.totalorder %v25, %v88
    %v90 = vsel %vm89, 1, 0
    %v91 = vcvt.s32.f32 %v90
    %v92 = vmul.f32 %v85, %v91
    %v93 = vsel %vm36, %v92, 0.0
    %94 = vadd.xlane.f32.xlu0 %v93
    %v95 = vpop.xlane.xlu0 %94
    %v96 = vadd.f32 %v82, %v95
    %s97 = sld [smem:[#allocation3 + $0x5]]
    %s98 = scalar_lea.vmem %s2, %s97
    %v99 = vld [vmem:[%s98] sm:$0x1]
    %100 = vst [vmem:[#allocation5 + $0x5] sm:$0x1] %v99
    %s101 = sld [smem:[#allocation4 + $0x5]]
    %v102 = vstv %s101
    %vm103 = vcmp.eq.s32.totalorder %v25, %v102
    %v104 = vsel %vm103, 1, 0
    %v105 = vcvt.s32.f32 %v104
    %v106 = vmul.f32 %v99, %v105
    %v107 = vsel %vm36, %v106, 0.0
    %108 = vadd.xlane.f32.xlu0 %v107
    %v109 = vpop.xlane.xlu0 %108
    %v110 = vadd.f32 %v96, %v109
    %s111 = sld [smem:[#allocation3 + $0x6]]
    %s112 = scalar_lea.vmem %s2, %s111
    %v113 = vld [vmem:[%s112] sm:$0x1]
    %114 = vst [vmem:[#allocation5 + $0x6] sm:$0x1] %v113
    %s115 = sld [smem:[#allocation4 + $0x6]]
    %v116 = vstv %s115
    %vm117 = vcmp.eq.s32.totalorder %v25, %v116
    %v118 = vsel %vm117, 1, 0
    %v119 = vcvt.s32.f32 %v118
    %v120 = vmul.f32 %v113, %v119
    %v121 = vsel %vm36, %v120, 0.0
    %122 = vadd.xlane.f32.xlu0 %v121
    %v123 = vpop.xlane.xlu0 %122
    %v124 = vadd.f32 %v110, %v123
    %s125 = sld [smem:[#allocation3 + $0x7]]
    %s126 = scalar_lea.vmem %s2, %s125
    %v127 = vld [vmem:[%s126] sm:$0x1]
    %128 = vst [vmem:[#allocation5 + $0x7] sm:$0x1] %v127
    %s129 = sld [smem:[#allocation4 + $0x7]]
    %v130 = vstv %s129
    %vm131 = vcmp.eq.s32.totalorder %v25, %v130
    %v132 = vsel %vm131, 1, 0
    %v133 = vcvt.s32.f32 %v132
    %v134 = vmul.f32 %v127, %v133
    %v135 = vsel %vm36, %v134, 0.0
    %136 = vadd.xlane.f32.xlu0 %v135
    %v137 = vpop.xlane.xlu0 %136
    %v138 = vadd.f32 %v124, %v137
    %s139 = sld [smem:[#allocation3 + $0x8]]
    %s140 = scalar_lea.vmem %s2, %s139
    %v141 = vld [vmem:[%s140] sm:$0x1]
    %142 = vst [vmem:[#allocation5 + $0x8] sm:$0x1] %v141
    %s143 = sld [smem:[#allocation4 + $0x8]]
    %v144 = vstv %s143
    %vm145 = vcmp.eq.s32.totalorder %v25, %v144
    %v146 = vsel %vm145, 1, 0
    %v147 = vcvt.s32.f32 %v146
    %v148 = vmul.f32 %v141, %v147
    %v149 = vsel %vm36, %v148, 0.0
    %150 = vadd.xlane.f32.xlu0 %v149
    %v151 = vpop.xlane.xlu0 %150
    %v152 = vadd.f32 %v138, %v151
    %s153 = sld [smem:[#allocation3 + $0x9]]
    %s154 = scalar_lea.vmem %s2, %s153
    %v155 = vld [vmem:[%s154] sm:$0x1]
    %156 = vst [vmem:[#allocation5 + $0x9] sm:$0x1] %v155
    %s157 = sld [smem:[#allocation4 + $0x9]]
    %v158 = vstv %s157
    %vm159 = vcmp.eq.s32.totalorder %v25, %v158
    %v160 = vsel %vm159, 1, 0
    %v161 = vcvt.s32.f32 %v160
    %v162 = vmul.f32 %v155, %v161
    %v163 = vsel %vm36, %v162, 0.0
    %164 = vadd.xlane.f32.xlu0 %v163
    %v165 = vpop.xlane.xlu0 %164
    %v166 = vadd.f32 %v152, %v165
    %s167 = sld [smem:[#allocation3 + $0xa]]
    %s168 = scalar_lea.vmem %s2, %s167
    %v169 = vld [vmem:[%s168] sm:$0x1]
    %170 = vst [vmem:[#allocation5 + $0xa] sm:$0x1] %v169
    %s171 = sld [smem:[#allocation4 + $0xa]]
    %v172 = vstv %s171
    %vm173 = vcmp.eq.s32.totalorder %v25, %v172
    %v174 = vsel %vm173, 1, 0
    %v175 = vcvt.s32.f32 %v174
    %v176 = vmul.f32 %v169, %v175
    %v177 = vsel %vm36, %v176, 0.0
    %178 = vadd.xlane.f32.xlu0 %v177
    %v179 = vpop.xlane.xlu0 %178
    %v180 = vadd.f32 %v166, %v179
    %s181 = sld [smem:[#allocation3 + $0xb]]
    %s182 = scalar_lea.vmem %s2, %s181
    %v183 = vld [vmem:[%s182] sm:$0x1]
    %184 = vst [vmem:[#allocation5 + $0xb] sm:$0x1] %v183
    %s185 = sld [smem:[#allocation4 + $0xb]]
    %v186 = vstv %s185
    %vm187 = vcmp.eq.s32.totalorder %v25, %v186
    %v188 = vsel %vm187, 1, 0
    %v189 = vcvt.s32.f32 %v188
    %v190 = vmul.f32 %v183, %v189
    %v191 = vsel %vm36, %v190, 0.0
    %192 = vadd.xlane.f32.xlu0 %v191
    %v193 = vpop.xlane.xlu0 %192
    %v194 = vadd.f32 %v180, %v193
    %s195 = sld [smem:[#allocation3 + $0xc]]
    %s196 = scalar_lea.vmem %s2, %s195
    %v197 = vld [vmem:[%s196] sm:$0x1]
    %198 = vst [vmem:[#allocation5 + $0xc] sm:$0x1] %v197
    %s199 = sld [smem:[#allocation4 + $0xc]]
    %v200 = vstv %s199
    %vm201 = vcmp.eq.s32.totalorder %v25, %v200
    %v202 = vsel %vm201, 1, 0
    %v203 = vcvt.s32.f32 %v202
    %v204 = vmul.f32 %v197, %v203
    %v205 = vsel %vm36, %v204, 0.0
    %206 = vadd.xlane.f32.xlu0 %v205
    %v207 = vpop.xlane.xlu0 %206
    %v208 = vadd.f32 %v194, %v207
    %s209 = sld [smem:[#allocation3 + $0xd]]
    %s210 = scalar_lea.vmem %s2, %s209
    %v211 = vld [vmem:[%s210] sm:$0x1]
    %212 = vst [vmem:[#allocation5 + $0xd] sm:$0x1] %v211
    %s213 = sld [smem:[#allocation4 + $0xd]]
    %v214 = vstv %s213
    %vm215 = vcmp.eq.s32.totalorder %v25, %v214
    %v216 = vsel %vm215, 1, 0
    %v217 = vcvt.s32.f32 %v216
    %v218 = vmul.f32 %v211, %v217
    %v219 = vsel %vm36, %v218, 0.0
    %220 = vadd.xlane.f32.xlu0 %v219
    %v221 = vpop.xlane.xlu0 %220
    %v222 = vadd.f32 %v208, %v221
    %s223 = sld [smem:[#allocation3 + $0xe]]
    %s224 = scalar_lea.vmem %s2, %s223
    %v225 = vld [vmem:[%s224] sm:$0x1]
    %226 = vst [vmem:[#allocation5 + $0xe] sm:$0x1] %v225
    %s227 = sld [smem:[#allocation4 + $0xe]]
    %v228 = vstv %s227
    %vm229 = vcmp.eq.s32.totalorder %v25, %v228
    %v230 = vsel %vm229, 1, 0
    %v231 = vcvt.s32.f32 %v230
    %v232 = vmul.f32 %v225, %v231
    %v233 = vsel %vm36, %v232, 0.0
    %234 = vadd.xlane.f32.xlu0 %v233
    %v235 = vpop.xlane.xlu0 %234
    %v236 = vadd.f32 %v222, %v235
    %s237 = sld [smem:[#allocation3 + $0xf]]
    %s238 = scalar_lea.vmem %s2, %s237
    %v239 = vld [vmem:[%s238] sm:$0x1]
    %240 = vst [vmem:[#allocation5 + $0xf] sm:$0x1] %v239
    %s241 = sld [smem:[#allocation4 + $0xf]]
    %v242 = vstv %s241
    %vm243 = vcmp.eq.s32.totalorder %v25, %v242
    %v244 = vsel %vm243, 1, 0
    %v245 = vcvt.s32.f32 %v244
    %v246 = vmul.f32 %v239, %v245
    %v247 = vsel %vm36, %v246, 0.0
    %248 = vadd.xlane.f32.xlu0 %v247
    %v249 = vpop.xlane.xlu0 %248
    %v250 = vadd.f32 %v236, %v249
    %v251 = vld [vmem:[#allocation5] sm:$0xff]
    %v252 = vld [vmem:[#allocation5 + $0x8] sm:$0xff]
    %vm253 = vcmp.lt.s32.totalorder %v25, 65
    %v254 = vsel %vm253, %v251, -inf
    %v255 = vsel %vm253, %v252, -inf
    %256 = vmax.xlane.f32.xlu0 %v254
    %v257 = vpop.xlane.xlu0 %256
    %258 = vmax.xlane.f32.xlu0 %v255
    %v259 = vpop.xlane.xlu0 %258
    %v260 = vsub.f32 %v254, %v257
    %v261 = vsub.f32 %v255, %v259
    %v262 = vmul.f32 %v260, 1.442695
    %v263 = vpow.pop %v262
    %v264 = vmul.f32 %v261, 1.442695
    %v265 = vpow.pop %v264
    %266 = vadd.xlane.f32.xlu0 %v263
    %v267 = vpop.xlane.xlu0 %266
    %268 = vadd.xlane.f32.xlu0 %v265
    %v269 = vpop.xlane.xlu0 %268
    %v270 = vlog2.pop %v267
    %v271 = vmul.f32 %v270, 0.6931472
    %v272 = vlog2.pop %v269
    %v273 = vmul.f32 %v272, 0.6931472
    %v274 = vadd.f32 %v257, %v271
    %v275 = vadd.f32 %v259, %v273
    %vm276 = vcmask 7168
    %v277 = vsel %vm276, %v274, 0.0
    %v278 = vsel %vm276, %v275, 0.0
    %v279 = vadd.f32 %v277, %v278
    %280 = vadd.xlane.f32.xlu0 %v279
    %v281 = vpop.xlane.xlu0 %280
    %v282 = vrot.slane %v281, 4
    %v283 = vadd.f32 %v281, %v282
    %v284 = vrot.slane %v283, 2
    %v285 = vadd.f32 %v283, %v284
    %v286 = vrot.slane %v285, 1
    %v287 = vadd.f32 %v285, %v286
    %s288 = vtos %v287
    %s289 = vtos %v250
    %s290 = ssub.f32 %s288, %s289
    %v291 = vrcp.pop 16.0
    %s292 = vtos %v291
    %s293 = smul.f32 %s290, %s292
    %s294 = scalar_lea.smem [#allocation8], 0
    %295 = sst [smem:[%s294]] %s293
    // Predicated region
    $region6: #{_bigram_pallas.1} parent=1 // pred_check
      _
    $region7: #{_bigram_pallas.1} parent=1 // pred_check_branch
      %297 = sbr.rel (0) target = $region9
    $region8: #{_bigram_pallas.1} parent=1 // pred_region
      %s299 = ssub.s32 256, 256
      %300 = vsyncadd [#allocation6], %s299
      %s301 = sshll.u32 [#allocation5], 4
      %s302 = int_to_ptr.vmem [resolvable:$true] %s301
      %307 = dma.vmem_to_hbm [thread:$0]  %s302, 256, %s3, [#allocation6], 128, 128, 8
    $region9: #{_bigram_pallas.1} parent=1 // pred_fallthru
      _
    // Predicated region
    $region10: #{_bigram_pallas.1} parent=1 // pred_check
      _
    $region11: #{_bigram_pallas.1} parent=1 // pred_check_branch
      %309 = sbr.rel (0) target = $region13
    $region12: #{_bigram_pallas.1} parent=1 // pred_region
      %s311 = ssub.s32 16, 16
      %312 = vsyncadd [#allocation7], %s311
      %315 = dma.smem_to_hbm [#allocation8], 16, %s4, [#allocation7]
    $region13: #{_bigram_pallas.1} parent=1 // pred_fallthru
      _
    // Predicated region
    $region14: #{_bigram_pallas.1} parent=1 // pred_check
      _
    $region15: #{_bigram_pallas.1} parent=1 // pred_check_branch
      %317 = sbr.rel (0) target = $region17
    $region16: #{_bigram_pallas.1} parent=1 // pred_region
      %318 = dma.done [#allocation6], 256
    $region17: #{_bigram_pallas.1} parent=1 // pred_fallthru
      _
    // Predicated region
    $region18: #{_bigram_pallas.1} parent=1 // pred_check
      _
    $region19: #{_bigram_pallas.1} parent=1 // pred_check_branch
      %320 = sbr.rel (0) target = $region21
    $region20: #{_bigram_pallas.1} parent=1 // pred_region
      %321 = dma.done [#allocation7], 16
    $region21: #{_bigram_pallas.1} parent=1 // pred_fallthru
      _
    %322 = sfence
    %323 = vsyncpa [#allocation6], 1
    %324 = vsyncpa [#allocation7], 1

</llo_original>
